<compile_context>
chip_gen: v6e
topology: v6e:2x2x1
jax: 0.10.0
libtpu: 0.0.40
codegen_flags: <defaults>
</compile_context>

<pallas_src>
import jax
import jax.numpy as jnp
from jax.experimental import pallas as pl
from jax.experimental.pallas import tpu as pltpu


def _round_up(x, m):
    return ((x + m - 1) // m) * m


def mlp_kernel(x_ref, w1_ref, b1_ref, w23_ref, b23_ref, o_ref):
    # Layer 1: (TB,256) @ (256,64) + (1,64) -> ReLU   (f32 accumulate)
    h1 = jnp.dot(x_ref[...], w1_ref[...], preferred_element_type=jnp.float32)
    h1 = jnp.maximum(h1 + b1_ref[...], 0.0)
    # Folded layers 2+3: (TB,64) @ (64,1) + b23       (f32 accumulate)
    h2 = jnp.dot(h1.astype(w23_ref.dtype), w23_ref[...],
                 preferred_element_type=jnp.float32)
    # Sigmoid in f32, cast to output dtype.
    o_ref[...] = jax.nn.sigmoid(h2 + b23_ref[0]).astype(o_ref.dtype)


def mlp_forward(emb, params, *, block_rows=1024, stream_dtype=None):
    """Fused MLP forward. `params` = (w1, b1, w2, b2, w3, b3), weights (in,out)."""
    w1, b1, w2, b2, w3, b3 = params
    B, F = emb.shape
    out_dtype = emb.dtype

    # Fold the two back-to-back affine layers (exact algebra, no nonlinearity
    # in between): x@w2+b2 -> (..)@w3+b3  ==  x @ (w2@w3) + (b2@w3 + b3).
    w23 = w2 @ w3                                  # (64, 1)
    b23 = (b2 @ w3 + b3).reshape((1,)).astype(jnp.float32)  # scalar, SMEM

    if stream_dtype is not None:
        emb = emb.astype(stream_dtype)
        w1 = w1.astype(stream_dtype)
        w23 = w23.astype(stream_dtype)
    b1 = b1.astype(jnp.float32)

    # Batch tile: multiple of 8 sublanes, capped at block_rows.
    tb = min(block_rows, _round_up(B, 8))
    Bp = _round_up(B, tb)
    if Bp != B:
        emb = jnp.pad(emb, ((0, Bp - B), (0, 0)))
    grid = (Bp // tb,)

    out = pl.pallas_call(
        mlp_kernel,
        out_shape=jax.ShapeDtypeStruct((Bp, 1), out_dtype),
        grid_spec=pltpu.PrefetchScalarGridSpec(
            num_scalar_prefetch=0,
            grid=grid,
            in_specs=[
                pl.BlockSpec((tb, F), lambda i: (i, 0)),        # emb: batch-tiled
                pl.BlockSpec(w1.shape, lambda i: (0, 0)),       # w1 resident
                pl.BlockSpec(b1.shape, lambda i: (0, 0)),       # b1 resident
                pl.BlockSpec(w23.shape, lambda i: (0, 0)),      # folded w2@w3
                pl.BlockSpec(memory_space=pltpu.MemorySpace.SMEM),  # folded bias
            ],
            out_specs=pl.BlockSpec((tb, 1), lambda i: (i, 0)),
        ),
        compiler_params=pltpu.CompilerParams(
            dimension_semantics=("parallel",),          # shard batch across TCs (v7x)
            vmem_limit_bytes=32 * 1024 * 1024,          # ample: 2x(tb,256) tiles << 32 MiB
        ),
    )(emb, w1, b1, w23, b23)
    return out[:B]


def init_params(key):
    # Deterministic init mimicking nn.Linear shapes; weights stored as (in, out).
    k1, k2, k3, k4, k5, k6 = jax.random.split(key, 6)

    def lin(kw, kb, fin, fout):
        bound = 1.0 / jnp.sqrt(fin)
        w = jax.random.uniform(kw, (fin, fout), jnp.float32, -bound, bound)
        b = jax.random.uniform(kb, (1, fout), jnp.float32, -bound, bound)
        return w, b

    w1, b1 = lin(k1, k2, 256, 64)
    w2, b2 = lin(k3, k4, 64, 16)
    w3, b3 = lin(k5, k6, 16, 1)
    return (w1, b1, w2, b2, w3, b3)


def _reference(emb, params):
    w1, b1, w2, b2, w3, b3 = params
    h = jnp.maximum(emb @ w1 + b1, 0.0)
    h = h @ w2 + b2
    return jax.nn.sigmoid(h @ w3 + b3)


if __name__ == "__main__":
    key = jax.random.PRNGKey(0)
    k_in, k_in2, k_p = jax.random.split(key, 3)
    params = init_params(k_p)

    # Small batch (not a multiple of 8) exercises the padding path.
    emb_small = jax.random.normal(k_in, (10, 256), jnp.float32)
    out_small = jax.block_until_ready(mlp_forward(emb_small, params))
    ref_small = _reference(emb_small, params)
    assert out_small.shape == (10, 1)
    assert jnp.allclose(out_small, ref_small, atol=1e-5, rtol=1e-5)

    # Larger batch exercises the multi-step pipelined grid (tb=1024, 3 tiles).
    emb_big = jax.random.normal(k_in2, (2500, 256), jnp.float32)
    out_big = jax.block_until_ready(mlp_forward(emb_big, params))
    ref_big = _reference(emb_big, params)
    assert out_big.shape == (2500, 1)
    assert jnp.allclose(out_big, ref_big, atol=1e-5, rtol=1e-5)

    # bf16 activation/weight streaming path (f32 accumulation), loose tolerance.
    out_bf16 = jax.block_until_ready(
        mlp_forward(emb_big, params, stream_dtype=jnp.bfloat16))
    assert out_bf16.shape == (2500, 1)
    assert jnp.allclose(out_bf16, ref_big, atol=5e-2)

    print("KERNEL_OK")
</pallas_src>

<mosaic_0001>
module attributes {stable_mosaic.version = 11 : i64} {
  func.func @mlp_kernel(%arg0: i32, %arg1: memref<16x256xf32, #tpu.memory_space<vmem>>, %arg2: memref<256x64xf32, #tpu.memory_space<vmem>>, %arg3: memref<1x64xf32, #tpu.memory_space<vmem>>, %arg4: memref<64x1xf32, #tpu.memory_space<vmem>>, %arg5: memref<1xf32, #tpu.memory_space<smem>>, %arg6: memref<16x1xf32, #tpu.memory_space<vmem>>) attributes {dimension_semantics = [#tpu.dimension_semantics<parallel>], iteration_bounds = array<i64: 1>, scalar_prefetch = 0 : i64, scratch_operands = 0 : i64, tpu.core_type = #tpu.core_type<tc>, window_params = [{transform_indices = @transform_0, window_bounds = array<i64: 16, 256>}, {pipeline_mode = #tpu.pipeline_mode<synchronous>, transform_indices = @transform_1, window_bounds = array<i64: 256, 64>}, {pipeline_mode = #tpu.pipeline_mode<synchronous>, transform_indices = @transform_2, window_bounds = array<i64: 1, 64>}, {pipeline_mode = #tpu.pipeline_mode<synchronous>, transform_indices = @transform_3, window_bounds = array<i64: 64, 1>}, {transform_indices = @transform_4, window_bounds = array<i64: 1>}, {transform_indices = @transform_5, window_bounds = array<i64: 16, 1>}]} {
    %c0 = arith.constant 0 : index
    %c0_0 = arith.constant 0 : index
    %0 = vector.load %arg1[%c0, %c0_0] : memref<16x256xf32, #tpu.memory_space<vmem>>, vector<16x256xf32>
    %c0_1 = arith.constant 0 : index
    %c0_2 = arith.constant 0 : index
    %1 = vector.load %arg2[%c0_1, %c0_2] : memref<256x64xf32, #tpu.memory_space<vmem>>, vector<256x64xf32>
    %cst = arith.constant dense<0.000000e+00> : vector<16x64xf32>
    %2 = tpu.matmul %0, %1, %cst {dimension_numbers = #tpu.dot_dimension_numbers<[1], [0], [0], [1], [0, 0, 1, 1], [], []>} : vector<16x256xf32>, vector<256x64xf32>, vector<16x64xf32> -> vector<16x64xf32>
    %c0_3 = arith.constant 0 : index
    %c0_4 = arith.constant 0 : index
    %3 = vector.load %arg3[%c0_3, %c0_4] : memref<1x64xf32, #tpu.memory_space<vmem>>, vector<1x64xf32>
    %4 = vector.broadcast %3 : vector<1x64xf32> to vector<16x64xf32>
    %5 = arith.addf %2, %4 : vector<16x64xf32>
    %cst_5 = arith.constant 0.000000e+00 : f32
    %6 = vector.broadcast %cst_5 : f32 to vector<16x64xf32>
    %7 = arith.maximumf %5, %6 : vector<16x64xf32>
    %c0_6 = arith.constant 0 : index
    %c0_7 = arith.constant 0 : index
    %8 = vector.load %arg4[%c0_6, %c0_7] : memref<64x1xf32, #tpu.memory_space<vmem>>, vector<64x1xf32>
    %cst_8 = arith.constant dense<0.000000e+00> : vector<16x1xf32>
    %9 = tpu.matmul %7, %8, %cst_8 {dimension_numbers = #tpu.dot_dimension_numbers<[1], [0], [0], [1], [0, 0, 1, 1], [], []>} : vector<16x64xf32>, vector<64x1xf32>, vector<16x1xf32> -> vector<16x1xf32>
    %c0_9 = arith.constant 0 : index
    %10 = memref.load %arg5[%c0_9] : memref<1xf32, #tpu.memory_space<smem>>
    %11 = vector.broadcast %10 : f32 to vector<16x1xf32>
    %12 = arith.addf %9, %11 : vector<16x1xf32>
    %13 = arith.negf %12 : vector<16x1xf32>
    %14 = math.exp %13 : vector<16x1xf32>
    %cst_10 = arith.constant 1.000000e+00 : f32
    %15 = vector.broadcast %cst_10 : f32 to vector<16x1xf32>
    %16 = arith.addf %15, %14 : vector<16x1xf32>
    %17 = arith.divf %15, %16 : vector<16x1xf32>
    %c0_11 = arith.constant 0 : index
    %c0_12 = arith.constant 0 : index
    %18 = vector.load %arg6[%c0_11, %c0_12] : memref<16x1xf32, #tpu.memory_space<vmem>>, vector<16x1xf32>
    tpu.vector_store %arg6[%c0_11, %c0_12], %17 {strides = array<i32>} : memref<16x1xf32, #tpu.memory_space<vmem>>, vector<16x1xf32>,
    return
  }
  func.func @transform_0(%arg0: i32) -> (i32, i32) {
    %c0_i32 = arith.constant 0 : i32
    %c0_i32_0 = arith.constant 0 : i32
    return %arg0, %c0_i32 : i32, i32
  }
  func.func @transform_1(%arg0: i32) -> (i32, i32) {
    %c0_i32 = arith.constant 0 : i32
    %c0_i32_0 = arith.constant 0 : i32
    %c0_i32_1 = arith.constant 0 : i32
    return %c0_i32, %c0_i32_0 : i32, i32
  }
  func.func @transform_2(%arg0: i32) -> (i32, i32) {
    %c0_i32 = arith.constant 0 : i32
    %c0_i32_0 = arith.constant 0 : i32
    %c0_i32_1 = arith.constant 0 : i32
    return %c0_i32, %c0_i32_0 : i32, i32
  }
  func.func @transform_3(%arg0: i32) -> (i32, i32) {
    %c0_i32 = arith.constant 0 : i32
    %c0_i32_0 = arith.constant 0 : i32
    %c0_i32_1 = arith.constant 0 : i32
    return %c0_i32, %c0_i32_0 : i32, i32
  }
  func.func @transform_4(%arg0: i32) -> i32 {
    %c0_i32 = arith.constant 0 : i32
    %c0_i32_0 = arith.constant 0 : i32
    return %c0_i32 : i32
  }
  func.func @transform_5(%arg0: i32) -> (i32, i32) {
    %c0_i32 = arith.constant 0 : i32
    %c0_i32_0 = arith.constant 0 : i32
    return %arg0, %c0_i32 : i32, i32
  }
}

</mosaic_0001>

<llo_original>
// kernel: tpu_custom_call.1
$region0: #{tpu_custom_call.1}
  #allocation0 [shape = 'u32[]', space=smem, size = 0x4, offset = 0x4, fixed_abs, tag = 'smem constant byte address 0x4 - core index']
  #allocation1 [shape = 'u32[144,128]{1,0:T(1,128)}', space=vmem, size = 0x12000, scoped, tag = 'internal scratch']
  #allocation2 [shape = 'f32[1]{0:T(128)S(6)}', space=smem, size = 0x200, scoped, tag = 'scoped memory for tpu_custom_call.1']
  %s0 = inlined_call_operand.vmem [shape: f32[16,256], index: 0, kind: input, shape index: {}]
  %s1 = inlined_call_operand.vmem [shape: f32[256,64], index: 1, kind: input, shape index: {}]
  %s2 = inlined_call_operand.vmem [shape: f32[1,64], index: 2, kind: input, shape index: {}]
  %s3 = inlined_call_operand.vmem [shape: f32[64,1], index: 3, kind: input, shape index: {}]
  %s4 = inlined_call_operand.<no memory space> [shape: f32[1], index: 4, kind: input, shape index: {}]
  %s5 = inlined_call_operand.vmem [shape: f32[16,1], index: 5, kind: output, shape index: {}]
  %s6 = sld [smem:[#allocation0]]
  $region30: #{tpu_custom_call.1} parent=0
    _
  %s8 = ssub.s32 1, %s6
  %s9 = scalar_select 0, %s8, %s6
  %10 = sst [smem:[#allocation2]] %s4
  // Predicated region
  $region2: #{tpu_custom_call.1} parent=0 // pred_check
    _
  $region3: #{tpu_custom_call.1} parent=0 // pred_check_branch
    %12 = sbr.rel (0) target = $region5
  $region4: #{tpu_custom_call.1} parent=0 // pred_region
    _
  $region5: #{tpu_custom_call.1} parent=0 // pred_fallthru
    _
  // Predicated region
  $region6: #{tpu_custom_call.1} parent=0 // pred_check
    _
  $region7: #{tpu_custom_call.1} parent=0 // pred_check_branch
    %14 = sbr.rel (0) target = $region9
  $region8: #{tpu_custom_call.1} parent=0 // pred_region
    _
  $region9: #{tpu_custom_call.1} parent=0 // pred_fallthru
    _
  // Predicated region
  $region10: #{tpu_custom_call.1} parent=0 // pred_check
    _
  $region11: #{tpu_custom_call.1} parent=0 // pred_check_branch
    %16 = sbr.rel (0) target = $region13
  $region12: #{tpu_custom_call.1} parent=0 // pred_region
    _
  $region13: #{tpu_custom_call.1} parent=0 // pred_fallthru
    _
  // Predicated region
  $region14: #{tpu_custom_call.1} parent=0 // pred_check
    _
  $region15: #{tpu_custom_call.1} parent=0 // pred_check_branch
    %18 = sbr.rel (0) target = $region17
  $region16: #{tpu_custom_call.1} parent=0 // pred_region
    _
  $region17: #{tpu_custom_call.1} parent=0 // pred_fallthru
    _
  // Predicated region
  $region18: #{tpu_custom_call.1} parent=0 // pred_check
    _
  $region19: #{tpu_custom_call.1} parent=0 // pred_check_branch
    %20 = sbr.rel (0) target = $region21
  $region20: #{tpu_custom_call.1} parent=0 // pred_region
    _
  $region21: #{tpu_custom_call.1} parent=0 // pred_fallthru
    _
  %v21 = vld [vmem:[%s0] sm:$0xff]
  %v22 = vld [vmem:[%s0 + $0x8] sm:$0xff]
  %v23 = vld [vmem:[%s0 + $0x10] sm:$0xff]
  %v24 = vld [vmem:[%s0 + $0x18] sm:$0xff]
  %v25 = vld [vmem:[%s1] sm:$0xff]
  %v26 = vld [vmem:[%s1 + $0x8] sm:$0xff]
  %v27 = vld [vmem:[%s1 + $0x10] sm:$0xff]
  %v28 = vld [vmem:[%s1 + $0x18] sm:$0xff]
  %v29 = vld [vmem:[%s1 + $0x20] sm:$0xff]
  %v30 = vld [vmem:[%s1 + $0x28] sm:$0xff]
  %v31 = vld [vmem:[%s1 + $0x30] sm:$0xff]
  %v32 = vld [vmem:[%s1 + $0x38] sm:$0xff]
  %v33 = vld [vmem:[%s1 + $0x40] sm:$0xff]
  %v34 = vld [vmem:[%s1 + $0x48] sm:$0xff]
  %v35 = vld [vmem:[%s1 + $0x50] sm:$0xff]
  %v36 = vld [vmem:[%s1 + $0x58] sm:$0xff]
  %v37 = vld [vmem:[%s1 + $0x60] sm:$0xff]
  %v38 = vld [vmem:[%s1 + $0x68] sm:$0xff]
  %v39 = vld [vmem:[%s1 + $0x70] sm:$0xff]
  %v40 = vld [vmem:[%s1 + $0x78] sm:$0xff]
  %v41 = vld [vmem:[%s1 + $0x80] sm:$0xff]
  %v42 = vld [vmem:[%s1 + $0x88] sm:$0xff]
  %v43 = vld [vmem:[%s1 + $0x90] sm:$0xff]
  %v44 = vld [vmem:[%s1 + $0x98] sm:$0xff]
  %v45 = vld [vmem:[%s1 + $0xa0] sm:$0xff]
  %v46 = vld [vmem:[%s1 + $0xa8] sm:$0xff]
  %v47 = vld [vmem:[%s1 + $0xb0] sm:$0xff]
  %v48 = vld [vmem:[%s1 + $0xb8] sm:$0xff]
  %v49 = vld [vmem:[%s1 + $0xc0] sm:$0xff]
  %v50 = vld [vmem:[%s1 + $0xc8] sm:$0xff]
  %v51 = vld [vmem:[%s1 + $0xd0] sm:$0xff]
  %v52 = vld [vmem:[%s1 + $0xd8] sm:$0xff]
  %v53 = vld [vmem:[%s1 + $0xe0] sm:$0xff]
  %v54 = vld [vmem:[%s1 + $0xe8] sm:$0xff]
  %v55 = vld [vmem:[%s1 + $0xf0] sm:$0xff]
  %v56 = vld [vmem:[%s1 + $0xf8] sm:$0xff]
  %v57 = vld [vmem:[%s2] sm:$0x1]
  %v59 = vlaneseq
  %v60 = vshrl.u32 %v59, 7
  %v61 = vsub.s32 0, %v60
  %v62 = vrot.slane %v57, %v61
  %64 = vmatprep.subr.mxu0 0.0
  %65 = vmatpush1.msra.mxu0 %v40
  %66 = vmatprep.subr.mxu0 0.0
  %67 = vmatpush1.msra.mxu0 %v39
  %68 = vmatprep.subr.mxu0 0.0
  %69 = vmatpush1.msra.mxu0 %v38
  %70 = vmatprep.subr.mxu0 0.0
  %71 = vmatpush1.msra.mxu0 %v37
  %72 = vmatprep.subr.mxu0 0.0
  %73 = vmatpush1.msra.mxu0 %v36
  %74 = vmatprep.subr.mxu0 0.0
  %75 = vmatpush1.msra.mxu0 %v35
  %76 = vmatprep.subr.mxu0 0.0
  %77 = vmatpush1.msra.mxu0 %v34
  %78 = vmatprep.subr.mxu0 0.0
  %79 = vmatpush1.msra.mxu0 %v33
  %80 = vmatprep.subr.mxu0 0.0
  %81 = vmatpush1.msra.mxu0 %v32
  %82 = vmatprep.subr.mxu0 0.0
  %83 = vmatpush1.msra.mxu0 %v31
  %84 = vmatprep.subr.mxu0 0.0
  %85 = vmatpush1.msra.mxu0 %v30
  %86 = vmatprep.subr.mxu0 0.0
  %87 = vmatpush1.msra.mxu0 %v29
  %88 = vmatprep.subr.mxu0 0.0
  %89 = vmatpush1.msra.mxu0 %v28
  %90 = vmatprep.subr.mxu0 0.0
  %91 = vmatpush1.msra.mxu0 %v27
  %92 = vmatprep.subr.mxu0 0.0
  %93 = vmatpush1.msra.mxu0 %v26
  %94 = vmatprep.subr.mxu0 0.0
  %95 = vmatpush1.msra.mxu0 %v25
  %96 = vmatprep.subr.mxu0 0.0
  %97 = vmatpush2.msra.mxu0 %v56
  %98 = vmatprep.subr.mxu0 0.0
  %99 = vmatpush2.msra.mxu0 %v55
  %100 = vmatprep.subr.mxu0 0.0
  %101 = vmatpush2.msra.mxu0 %v54
  %102 = vmatprep.subr.mxu0 0.0
  %103 = vmatpush2.msra.mxu0 %v53
  %104 = vmatprep.subr.mxu0 0.0
  %105 = vmatpush2.msra.mxu0 %v52
  %106 = vmatprep.subr.mxu0 0.0
  %107 = vmatpush2.msra.mxu0 %v51
  %108 = vmatprep.subr.mxu0 0.0
  %109 = vmatpush2.msra.mxu0 %v50
  %110 = vmatprep.subr.mxu0 0.0
  %111 = vmatpush2.msra.mxu0 %v49
  %112 = vmatprep.subr.mxu0 0.0
  %113 = vmatpush2.msra.mxu0 %v48
  %114 = vmatprep.subr.mxu0 0.0
  %115 = vmatpush2.msra.mxu0 %v47
  %116 = vmatprep.subr.mxu0 0.0
  %117 = vmatpush2.msra.mxu0 %v46
  %118 = vmatprep.subr.mxu0 0.0
  %119 = vmatpush2.msra.mxu0 %v45
  %120 = vmatprep.subr.mxu0 0.0
  %121 = vmatpush2.msra.mxu0 %v44
  %122 = vmatprep.subr.mxu0 0.0
  %123 = vmatpush2.msra.mxu0 %v43
  %124 = vmatprep.subr.mxu0 0.0
  %125 = vmatpush2.msra.mxu0 %v42
  %126 = vmatprep.subr.mxu0 0.0
  %127 = vmatpush2.msra.mxu0 %v41
  %128 = vmatprep.mubr.f32.mxu0 %v22
  %129 = vmatmul.mubr.f32.gmra.mxu0 %v21
  %v130 = vpop.f32.mrf.mxu0
  %v131 = vadd.f32 %v62, %v130
  %v132 = vpop.f32.mrf.mxu0
  %133 = vmatprep.mubr.f32.mxu0 %v24
  %134 = vmatmul.mubr.f32.gmra.mxu0 %v23
  %v135 = vpop.f32.mrf.mxu0
  %v136 = vadd.f32 %v62, %v135
  %v137 = vpop.f32.mrf.mxu0
  %138 = vdwg.mxu0
  %v139 = vmax.f32 %v131, 0.0
  %v140 = vmax.f32 %v136, 0.0
  %v141 = vld [vmem:[%s3] sm:$0xff]
  %v142 = vld [vmem:[%s3 + $0x8] sm:$0xff]
  %v143 = vld [vmem:[%s3 + $0x10] sm:$0xff]
  %v144 = vld [vmem:[%s3 + $0x18] sm:$0xff]
  %v145 = vld [vmem:[%s3 + $0x20] sm:$0xff]
  %v146 = vld [vmem:[%s3 + $0x28] sm:$0xff]
  %v147 = vld [vmem:[%s3 + $0x30] sm:$0xff]
  %v148 = vld [vmem:[%s3 + $0x38] sm:$0xff]
  %s149 = sld [smem:[#allocation2]]
  %v150 = vstv %s149
  %vm151 = vcmask 523264
  %v153 = vsel %vm151, %v139, 0
  %v156 = vsel %vm151, %v140, 0
  %158 = vmatprep.subr.mxu0 0.0
  %159 = vmatpush1.msra.mxu0 0.0
  %160 = vmatprep.subr.mxu0 0.0
  %161 = vmatpush1.msra.mxu0 0.0
  %162 = vmatprep.subr.mxu0 0.0
  %163 = vmatpush1.msra.mxu0 0.0
  %164 = vmatprep.subr.mxu0 0.0
  %165 = vmatpush1.msra.mxu0 0.0
  %166 = vmatprep.subr.mxu0 0.0
  %167 = vmatpush1.msra.mxu0 0.0
  %168 = vmatprep.subr.mxu0 0.0
  %169 = vmatpush1.msra.mxu0 0.0
  %170 = vmatprep.subr.mxu0 0.0
  %171 = vmatpush1.msra.mxu0 0.0
  %172 = vmatprep.subr.mxu0 0.0
  %173 = vmatpush1.msra.mxu0 0.0
  %174 = vmatprep.subr.mxu0 0.0
  %175 = vmatpush1.msra.mxu0 %v148
  %176 = vmatprep.subr.mxu0 0.0
  %177 = vmatpush1.msra.mxu0 %v147
  %178 = vmatprep.subr.mxu0 0.0
  %179 = vmatpush1.msra.mxu0 %v146
  %180 = vmatprep.subr.mxu0 0.0
  %181 = vmatpush1.msra.mxu0 %v145
  %182 = vmatprep.subr.mxu0 0.0
  %183 = vmatpush1.msra.mxu0 %v144
  %184 = vmatprep.subr.mxu0 0.0
  %185 = vmatpush1.msra.mxu0 %v143
  %186 = vmatprep.subr.mxu0 0.0
  %187 = vmatpush1.msra.mxu0 %v142
  %188 = vmatprep.subr.mxu0 0.0
  %189 = vmatpush1.msra.mxu0 %v141
  %190 = vmatprep.subr.mxu0 0.0
  %191 = vmatpush2.msra.mxu0 0.0
  %192 = vmatprep.subr.mxu0 0.0
  %193 = vmatpush2.msra.mxu0 0.0
  %194 = vmatprep.subr.mxu0 0.0
  %195 = vmatpush2.msra.mxu0 0.0
  %196 = vmatprep.subr.mxu0 0.0
  %197 = vmatpush2.msra.mxu0 0.0
  %198 = vmatprep.subr.mxu0 0.0
  %199 = vmatpush2.msra.mxu0 0.0
  %200 = vmatprep.subr.mxu0 0.0
  %201 = vmatpush2.msra.mxu0 0.0
  %202 = vmatprep.subr.mxu0 0.0
  %203 = vmatpush2.msra.mxu0 0.0
  %204 = vmatprep.subr.mxu0 0.0
  %205 = vmatpush2.msra.mxu0 0.0
  %206 = vmatprep.subr.mxu0 0.0
  %207 = vmatpush2.msra.mxu0 0.0
  %208 = vmatprep.subr.mxu0 0.0
  %209 = vmatpush2.msra.mxu0 0.0
  %210 = vmatprep.subr.mxu0 0.0
  %211 = vmatpush2.msra.mxu0 0.0
  %212 = vmatprep.subr.mxu0 0.0
  %213 = vmatpush2.msra.mxu0 0.0
  %214 = vmatprep.subr.mxu0 0.0
  %215 = vmatpush2.msra.mxu0 0.0
  %216 = vmatprep.subr.mxu0 0.0
  %217 = vmatpush2.msra.mxu0 0.0
  %218 = vmatprep.subr.mxu0 0.0
  %219 = vmatpush2.msra.mxu0 0.0
  %220 = vmatprep.subr.mxu0 0.0
  %221 = vmatpush2.msra.mxu0 0.0
  %222 = vmatprep.mubr.f32.mxu0 0.0
  %223 = vmatmul.mubr.f32.gmra.mxu0 %v153
  %v224 = vpop.f32.mrf.mxu0
  %v225 = vadd.f32 %v150, %v224
  %v226 = vpop.f32.mrf.mxu0
  %227 = vmatprep.mubr.f32.mxu0 0.0
  %228 = vmatmul.mubr.f32.gmra.mxu0 %v156
  %v229 = vpop.f32.mrf.mxu0
  %v230 = vadd.f32 %v150, %v229
  %v231 = vpop.f32.mrf.mxu0
  %232 = vdwg.mxu0
  %v233 = vxor.u32 %v225, 2147483648
  %v234 = vxor.u32 %v230, 2147483648
  %v235 = vmul.f32 %v233, 1.442695
  %v236 = vpow.pop %v235
  %v237 = vmul.f32 %v234, 1.442695
  %v238 = vpow.pop %v237
  %v239 = vadd.f32 %v236, 1.0
  %v240 = vadd.f32 %v238, 1.0
  %v241 = vrcp.pop %v239
  %v242 = vmul.f32 1.0, %v241
  %v243 = vrcp.pop %v240
  %v244 = vmul.f32 1.0, %v243
  %vm245 = vcmask 7168
  %246 = vst.msk [vmem:[%s5] sm:$0xff] %vm245, %v242
  %247 = vst.msk [vmem:[%s5 + $0x8] sm:$0xff] %vm245, %v244
  // Predicated region
  $region22: #{tpu_custom_call.1} parent=0 // pred_check
    _
  $region23: #{tpu_custom_call.1} parent=0 // pred_check_branch
    %249 = sbr.rel (0) target = $region25
  $region24: #{tpu_custom_call.1} parent=0 // pred_region
    _
  $region25: #{tpu_custom_call.1} parent=0 // pred_fallthru
    _
  // Predicated region
  $region26: #{tpu_custom_call.1} parent=0 // pred_check
    _
  $region27: #{tpu_custom_call.1} parent=0 // pred_check_branch
    %251 = sbr.rel (0) target = $region29
  $region28: #{tpu_custom_call.1} parent=0 // pred_region
    _
  $region29: #{tpu_custom_call.1} parent=0 // pred_fallthru
    _

</llo_original>
